<compile_context>
chip_gen: v7x
topology: tpu7x:2x2x1
jax: 0.10.0
libtpu: 0.0.40
codegen_flags: <defaults>
</compile_context>

<pallas_src>
import functools

import jax
import jax.numpy as jnp
from jax.experimental import pallas as pl
from jax.experimental.pallas import tpu as pltpu


def _round_up(x, m):
    return ((x + m - 1) // m) * m


def gate_kernel(x_ent_ref, x_lit_ref, w_ent_ref, w_lit_ref, b_ref, out_ref, *,
                matmul_dtype, half):
    """half = PACK*E : lane offset splitting the fused slab into tanh | sigmoid."""
    xe = x_ent_ref[...].astype(jnp.float32)      # (bbp, PACK*E)  packed x_ent (f32 residual)
    xl = x_lit_ref[...]                          # (bbp, PACK*L)  packed x_lit

    # Two MXU matmuls over block-diagonal fused weights -> (bbp, 2*PACK*E) f32 slab.
    acc = (
        jnp.dot(xe.astype(matmul_dtype), w_ent_ref[...],
                preferred_element_type=jnp.float32)
        + jnp.dot(xl.astype(matmul_dtype), w_lit_ref[...],
                  preferred_element_type=jnp.float32)
        + b_ref[...]
    )

    # Lanes [0:half) -> tanh branch, [half:2*half) -> gate branch; both slices are
    # vreg-aligned (half is a multiple of 128 in the packed layout) and aligned
    # lane-for-lane with the packed x_ent.
    g_emb = jnp.tanh(acc[:, :half])
    # sigmoid(z) = 0.5*(tanh(0.5*z)+1): single EUP push instead of exp + reciprocal.
    gate = 0.5 * (jnp.tanh(0.5 * acc[:, half:]) + 1.0)

    # (1-gate)*x + gate*g  ==  x + gate*(g - x)   (one fewer VPU op)
    out_ref[...] = (xe + gate * (g_emb - xe)).astype(out_ref.dtype)


def prepare_gate_params(params, matmul_dtype=jnp.float32):
    """One-time weight prep (transpose / fuse / block-diag replicate / cast).

    params (PyTorch nn.Linear convention, [out, in]):
      g_w:  [E, E+L]   g_b: [E]
      g1_w: [E, E]     g2_w: [E, L]     gate_bias: [E]
    """
    E = params["g1_w"].shape[0]
    L = params["g2_w"].shape[1]
    pack = 128 // E if (E <= 128 and 128 % E == 0) else 1  # batch rows packed per lane row

    g_w = params["g_w"]
    w_ent_tanh = g_w[:, :E].T          # (E, E)  g()'s x_ent columns
    w_ent_sig = params["g1_w"].T       # (E, E)  g1
    w_lit_tanh = g_w[:, E:].T          # (L, E)  g()'s x_lit columns
    w_lit_sig = params["g2_w"].T       # (L, E)  g2

    def block_diag_rep(w):             # (in, E) -> (pack*in, pack*E)
        in_dim = w.shape[0]
        out = jnp.zeros((pack * in_dim, pack * E), w.dtype)
        for j in range(pack):
            out = out.at[j * in_dim:(j + 1) * in_dim, j * E:(j + 1) * E].set(w)
        return out

    # Column layout of the fused result: [ tanh (PACK*E lanes) | sigmoid (PACK*E lanes) ],
    # each half aligned with the packed x_ent layout.
    w_ent_bd = jnp.concatenate(
        [block_diag_rep(w_ent_tanh), block_diag_rep(w_ent_sig)], axis=1)
    w_lit_bd = jnp.concatenate(
        [block_diag_rep(w_lit_tanh), block_diag_rep(w_lit_sig)], axis=1)
    b = jnp.concatenate(
        [jnp.tile(params["g_b"], pack), jnp.tile(params["gate_bias"], pack)])

    return {
        "w_ent": w_ent_bd.astype(matmul_dtype),              # (PACK*E, 2*PACK*E)
        "w_lit": w_lit_bd.astype(matmul_dtype),              # (PACK*L, 2*PACK*E)
        "b": b.reshape(1, 2 * pack * E).astype(jnp.float32),  # (1, 2*PACK*E)
        "E": E, "L": L, "pack": pack,
    }


def gate_forward(x_ent, x_lit, prepared, *, block_b=8192, out_dtype=None):
    """JAX/Pallas equivalent of Gate.forward using pre-fused block-diagonal weights."""
    E, L, pack = prepared["E"], prepared["L"], prepared["pack"]
    B = x_ent.shape[0]
    assert x_ent.shape[1] == E and x_lit.shape[1] == L
    out_dtype = out_dtype or x_ent.dtype   # consumers tolerating bf16 can pass it here

    # Pad batch so it packs into full lane rows (no-op when B % pack == 0).
    Bpad = _round_up(B, pack)
    if Bpad != B:
        x_ent = jnp.pad(x_ent, ((0, Bpad - B), (0, 0)))
        x_lit = jnp.pad(x_lit, ((0, Bpad - B), (0, 0)))
    Bp = Bpad // pack

    # Lane-dense packing: free row-major reshapes (no HBM round-trip, no cast).
    x_ent_p = x_ent.reshape(Bp, pack * E)    # (Bp, 128) for E=32
    x_lit_p = x_lit.reshape(Bp, pack * L)    # (Bp, 256) for L=64

    # Batch tile in packed rows: big tiles to amortize ~0.35us/step overhead,
    # and >=2 grid steps whenever possible so "parallel" splits across v7x's 2 TCs.
    if Bp <= 8:
        bbp = Bp                              # block == full dim (always legal)
    else:
        target = min(max(block_b // pack, 8), Bp)
        if Bp >= 16:
            target = min(target, pl.cdiv(Bp, 2))
        bbp = _round_up(target, 8)
    grid = (pl.cdiv(Bp, bbp),)

    const = lambda i: (0, 0)                  # weights / bias: pipeline-invariant blocks
    matmul_dtype = prepared["w_ent"].dtype

    out_p = pl.pallas_call(
        functools.partial(gate_kernel, matmul_dtype=matmul_dtype, half=pack * E),
        out_shape=jax.ShapeDtypeStruct((Bp, pack * E), out_dtype),
        grid_spec=pltpu.PrefetchScalarGridSpec(
            num_scalar_prefetch=0,
            grid=grid,
            in_specs=[
                pl.BlockSpec((bbp, pack * E), lambda i: (i, 0)),   # packed x_ent tile
                pl.BlockSpec((bbp, pack * L), lambda i: (i, 0)),   # packed x_lit tile
                pl.BlockSpec(prepared["w_ent"].shape, const),      # fused W_ent (block-diag)
                pl.BlockSpec(prepared["w_lit"].shape, const),      # fused W_lit (block-diag)
                pl.BlockSpec((1, 2 * pack * E), const),            # fused bias
            ],
            out_specs=pl.BlockSpec((bbp, pack * E), lambda i: (i, 0)),
        ),
        compiler_params=pltpu.CompilerParams(
            dimension_semantics=("parallel",)),
    )(x_ent_p, x_lit_p, prepared["w_ent"], prepared["w_lit"], prepared["b"])

    out = out_p.reshape(Bpad, E)
    return out[:B] if Bpad != B else out


def gate_reference(x_ent, x_lit, params):
    """Pure-JAX reference mirroring the PyTorch module."""
    x = jnp.concatenate([x_ent, x_lit], axis=1)
    g_embedded = jnp.tanh(x @ params["g_w"].T + params["g_b"])
    gate = jax.nn.sigmoid(
        x_ent @ params["g1_w"].T + x_lit @ params["g2_w"].T + params["gate_bias"]
    )
    return (1.0 - gate) * x_ent + gate * g_embedded


if __name__ == "__main__":
    OUTPUT_SIZE = 32                 # E (hidden)
    INPUT_SIZE = 96                  # E + L
    L = INPUT_SIZE - OUTPUT_SIZE     # 64

    key = jax.random.PRNGKey(0)
    ks = jax.random.split(key, 10)

    # Deterministic synthetic parameters (PyTorch nn.Linear convention [out, in]).
    params = {
        "g_w": jax.random.normal(ks[0], (OUTPUT_SIZE, INPUT_SIZE), jnp.float32) * 0.05,
        "g_b": jax.random.normal(ks[1], (OUTPUT_SIZE,), jnp.float32) * 0.05,
        "g1_w": jax.random.normal(ks[2], (OUTPUT_SIZE, OUTPUT_SIZE), jnp.float32) * 0.05,
        "g2_w": jax.random.normal(ks[3], (OUTPUT_SIZE, L), jnp.float32) * 0.05,
        "gate_bias": jnp.zeros((OUTPUT_SIZE,), jnp.float32),
    }

    # --- Test 1: f32 matmuls, single grid step (tiny batch). ---
    B1 = 16
    x_ent1 = jax.random.normal(ks[4], (B1, OUTPUT_SIZE), jnp.float32)
    x_lit1 = jax.random.normal(ks[5], (B1, L), jnp.float32)
    prep_f32 = prepare_gate_params(params, matmul_dtype=jnp.float32)
    out1 = jax.block_until_ready(gate_forward(x_ent1, x_lit1, prep_f32))
    ref1 = gate_reference(x_ent1, x_lit1, params)
    assert out1.shape == (B1, OUTPUT_SIZE)
    assert jnp.allclose(out1, ref1, atol=2e-5, rtol=2e-5)

    # --- Test 2: bf16 matmul operands (f32 residual & accumulation), 3-step parallel grid. ---
    B2 = 96
    x_ent2 = jax.random.normal(ks[6], (B2, OUTPUT_SIZE), jnp.float32)
    x_lit2 = jax.random.normal(ks[7], (B2, L), jnp.float32)
    prep_bf16 = prepare_gate_params(params, matmul_dtype=jnp.bfloat16)
    out2 = jax.block_until_ready(gate_forward(x_ent2, x_lit2, prep_bf16, block_b=32))
    ref2 = gate_reference(x_ent2, x_lit2, params)
    assert out2.shape == (B2, OUTPUT_SIZE)
    assert jnp.allclose(out2, ref2, atol=3e-2, rtol=3e-2)

    # --- Test 3: ragged batch (not a multiple of the lane pack), padding path. ---
    B3 = 27
    x_ent3 = jax.random.normal(ks[8], (B3, OUTPUT_SIZE), jnp.float32)
    x_lit3 = jax.random.normal(ks[9], (B3, L), jnp.float32)
    out3 = jax.block_until_ready(gate_forward(x_ent3, x_lit3, prep_f32))
    ref3 = gate_reference(x_ent3, x_lit3, params)
    assert out3.shape == (B3, OUTPUT_SIZE)
    assert jnp.allclose(out3, ref3, atol=2e-5, rtol=2e-5)

    print("KERNEL_OK")
</pallas_src>

<mosaic_0001>
module attributes {stable_mosaic.version = 11 : i64} {
  func.func @gate_kernel(%arg0: i32, %arg1: memref<4x128xf32, #tpu.memory_space<vmem>>, %arg2: memref<4x256xf32, #tpu.memory_space<vmem>>, %arg3: memref<128x256xf32, #tpu.memory_space<vmem>>, %arg4: memref<256x256xf32, #tpu.memory_space<vmem>>, %arg5: memref<1x256xf32, #tpu.memory_space<vmem>>, %arg6: memref<4x128xf32, #tpu.memory_space<vmem>>) attributes {dimension_semantics = [#tpu.dimension_semantics<parallel>], iteration_bounds = array<i64: 1>, scalar_prefetch = 0 : i64, scratch_operands = 0 : i64, tpu.core_type = #tpu.core_type<tc>, window_params = [{transform_indices = @transform_0, window_bounds = array<i64: 4, 128>}, {transform_indices = @transform_1, window_bounds = array<i64: 4, 256>}, {pipeline_mode = #tpu.pipeline_mode<synchronous>, transform_indices = @transform_2, window_bounds = array<i64: 128, 256>}, {pipeline_mode = #tpu.pipeline_mode<synchronous>, transform_indices = @transform_3, window_bounds = array<i64: 256, 256>}, {pipeline_mode = #tpu.pipeline_mode<synchronous>, transform_indices = @transform_4, window_bounds = array<i64: 1, 256>}, {transform_indices = @transform_5, window_bounds = array<i64: 4, 128>}]} {
    %c0 = arith.constant 0 : index
    %c0_0 = arith.constant 0 : index
    %0 = vector.load %arg1[%c0, %c0_0] : memref<4x128xf32, #tpu.memory_space<vmem>>, vector<4x128xf32>
    %c0_1 = arith.constant 0 : index
    %c0_2 = arith.constant 0 : index
    %1 = vector.load %arg2[%c0_1, %c0_2] : memref<4x256xf32, #tpu.memory_space<vmem>>, vector<4x256xf32>
    %c0_3 = arith.constant 0 : index
    %c0_4 = arith.constant 0 : index
    %2 = vector.load %arg3[%c0_3, %c0_4] : memref<128x256xf32, #tpu.memory_space<vmem>>, vector<128x256xf32>
    %cst = arith.constant dense<0.000000e+00> : vector<4x256xf32>
    %3 = tpu.matmul %0, %2, %cst {dimension_numbers = #tpu.dot_dimension_numbers<[1], [0], [0], [1], [0, 0, 1, 1], [], []>} : vector<4x128xf32>, vector<128x256xf32>, vector<4x256xf32> -> vector<4x256xf32>
    %c0_5 = arith.constant 0 : index
    %c0_6 = arith.constant 0 : index
    %4 = vector.load %arg4[%c0_5, %c0_6] : memref<256x256xf32, #tpu.memory_space<vmem>>, vector<256x256xf32>
    %cst_7 = arith.constant dense<0.000000e+00> : vector<4x256xf32>
    %5 = tpu.matmul %1, %4, %cst_7 {dimension_numbers = #tpu.dot_dimension_numbers<[1], [0], [0], [1], [0, 0, 1, 1], [], []>} : vector<4x256xf32>, vector<256x256xf32>, vector<4x256xf32> -> vector<4x256xf32>
    %6 = arith.addf %3, %5 : vector<4x256xf32>
    %c0_8 = arith.constant 0 : index
    %c0_9 = arith.constant 0 : index
    %7 = vector.load %arg5[%c0_8, %c0_9] : memref<1x256xf32, #tpu.memory_space<vmem>>, vector<1x256xf32>
    %8 = vector.broadcast %7 : vector<1x256xf32> to vector<4x256xf32>
    %9 = arith.addf %6, %8 : vector<4x256xf32>
    %10 = vector.extract_strided_slice %9 {offsets = [0, 0], sizes = [4, 128], strides = [1, 1]} : vector<4x256xf32> to vector<4x128xf32>
    %11 = math.tanh %10 : vector<4x128xf32>
    %12 = vector.extract_strided_slice %9 {offsets = [0, 128], sizes = [4, 128], strides = [1, 1]} : vector<4x256xf32> to vector<4x128xf32>
    %cst_10 = arith.constant 5.000000e-01 : f32
    %13 = vector.broadcast %cst_10 : f32 to vector<4x128xf32>
    %14 = arith.mulf %13, %12 : vector<4x128xf32>
    %15 = math.tanh %14 : vector<4x128xf32>
    %cst_11 = arith.constant 1.000000e+00 : f32
    %16 = vector.broadcast %cst_11 : f32 to vector<4x128xf32>
    %17 = arith.addf %15, %16 : vector<4x128xf32>
    %cst_12 = arith.constant 5.000000e-01 : f32
    %18 = vector.broadcast %cst_12 : f32 to vector<4x128xf32>
    %19 = arith.mulf %18, %17 : vector<4x128xf32>
    %20 = arith.subf %11, %0 : vector<4x128xf32>
    %21 = arith.mulf %19, %20 : vector<4x128xf32>
    %22 = arith.addf %0, %21 : vector<4x128xf32>
    %c0_13 = arith.constant 0 : index
    %c0_14 = arith.constant 0 : index
    %23 = vector.load %arg6[%c0_13, %c0_14] : memref<4x128xf32, #tpu.memory_space<vmem>>, vector<4x128xf32>
    tpu.vector_store %arg6[%c0_13, %c0_14], %22 {strides = array<i32>} : memref<4x128xf32, #tpu.memory_space<vmem>>, vector<4x128xf32>,
    return
  }
  func.func @transform_0(%arg0: i32) -> (i32, i32) {
    %c0_i32 = arith.constant 0 : i32
    %c0_i32_0 = arith.constant 0 : i32
    return %arg0, %c0_i32 : i32, i32
  }
  func.func @transform_1(%arg0: i32) -> (i32, i32) {
    %c0_i32 = arith.constant 0 : i32
    %c0_i32_0 = arith.constant 0 : i32
    return %arg0, %c0_i32 : i32, i32
  }
  func.func @transform_2(%arg0: i32) -> (i32, i32) {
    %c0_i32 = arith.constant 0 : i32
    %c0_i32_0 = arith.constant 0 : i32
    %c0_i32_1 = arith.constant 0 : i32
    return %c0_i32, %c0_i32_0 : i32, i32
  }
  func.func @transform_3(%arg0: i32) -> (i32, i32) {
    %c0_i32 = arith.constant 0 : i32
    %c0_i32_0 = arith.constant 0 : i32
    %c0_i32_1 = arith.constant 0 : i32
    return %c0_i32, %c0_i32_0 : i32, i32
  }
  func.func @transform_4(%arg0: i32) -> (i32, i32) {
    %c0_i32 = arith.constant 0 : i32
    %c0_i32_0 = arith.constant 0 : i32
    %c0_i32_1 = arith.constant 0 : i32
    return %c0_i32, %c0_i32_0 : i32, i32
  }
  func.func @transform_5(%arg0: i32) -> (i32, i32) {
    %c0_i32 = arith.constant 0 : i32
    %c0_i32_0 = arith.constant 0 : i32
    return %arg0, %c0_i32 : i32, i32
  }
}

</mosaic_0001>

<llo_original>
// kernel: tpu_custom_call.1
$region0: #{tpu_custom_call.1}
  #allocation0 [shape = 'u32[]', space=smem, size = 0x4, offset = 0x4, fixed_abs, tag = 'smem constant byte address 0x4 - core index']
  #allocation1 [shape = 'u32[144,128]{1,0:T(1,128)}', space=vmem, size = 0x12000, scoped, tag = 'internal scratch']
  %s0 = inlined_call_operand.hbm [shape: f32[4,128], index: 0, kind: input, shape index: {}]
  %s1 = inlined_call_operand.hbm [shape: f32[4,256], index: 1, kind: input, shape index: {}]
  %s2 = inlined_call_operand.hbm [shape: f32[128,256], index: 2, kind: input, shape index: {}]
  %s3 = inlined_call_operand.hbm [shape: f32[256,256], index: 3, kind: input, shape index: {}]
  %s4 = inlined_call_operand.vmem [shape: f32[1,256], index: 4, kind: input, shape index: {}]
  %s5 = inlined_call_operand.hbm [shape: f32[4,128], index: 5, kind: output, shape index: {}]
  %s6 = sld [smem:[#allocation0]]
  $region46: #{tpu_custom_call.1} parent=0
    _
  %s8 = ssub.s32 1, %s6
  %s9 = scalar_select 0, %s8, %s6
  $region1: #{tpu_custom_call.1} parent=0
    #allocation2 [shape = 'u8[2048]{0}', space=vmem, size = 0x800, scoped, tag = 'input window, operand 0, single buffered']
    #allocation3 [shape = 's32[1]{0}', space=sflag, size = 0x4, scoped, tag = 'scoped memory for tpu_custom_call.1']
    #allocation4 [shape = 's32[1]{0}', space=sflag, size = 0x4, scoped, tag = 'scoped memory for tpu_custom_call.1']
    #allocation5 [shape = 'u8[4096]{0}', space=vmem, size = 0x1000, scoped, tag = 'input window, operand 1, single buffered']
    #allocation6 [shape = 's32[1]{0}', space=sflag, size = 0x4, scoped, tag = 'scoped memory for tpu_custom_call.1']
    #allocation7 [shape = 'u8[131072]{0}', space=vmem, size = 0x20000, scoped, tag = 'input window, operand 2, single buffered']
    #allocation8 [shape = 'u8[262144]{0}', space=vmem, size = 0x40000, scoped, tag = 'input window, operand 3, single buffered']
    #allocation9 [shape = 's32[1]{0}', space=sflag, size = 0x4, scoped, tag = 'scoped memory for tpu_custom_call.1']
    #allocation10 [shape = 'u8[2048]{0}', space=vmem, size = 0x800, scoped, tag = 'output window, operand 0, single buffered']
    %10 = vsyncpa [#allocation3], 0
    %11 = vsyncpa [#allocation6], 0
    %12 = vsyncpa [#allocation9], 0
    %13 = vsyncpa [#allocation4], 0
    // Predicated region
    $region2: #{tpu_custom_call.1} parent=1 // pred_check
      _
    $region3: #{tpu_custom_call.1} parent=1 // pred_check_branch
      %15 = sbr.rel (0) target = $region5
    $region4: #{tpu_custom_call.1} parent=1 // pred_region
      %s17 = ssub.s32 64, 64
      %18 = vsyncadd [#allocation3], %s17
      %s20 = sshll.u32 [#allocation2], 4
      %s21 = int_to_ptr.vmem [resolvable:$true] %s20
      %23 = dma.hbm_to_vmem [thread:$0]  %s0, 64, %s21, [#allocation3]
    $region5: #{tpu_custom_call.1} parent=1 // pred_fallthru
      _
    // Predicated region
    $region6: #{tpu_custom_call.1} parent=1 // pred_check
      _
    $region7: #{tpu_custom_call.1} parent=1 // pred_check_branch
      %25 = sbr.rel (0) target = $region9
    $region8: #{tpu_custom_call.1} parent=1 // pred_region
      %s27 = ssub.s32 128, 128
      %28 = vsyncadd [#allocation6], %s27
      %s30 = sshll.u32 [#allocation5], 4
      %s31 = int_to_ptr.vmem [resolvable:$true] %s30
      %33 = dma.hbm_to_vmem [thread:$0]  %s1, 128, %s31, [#allocation6]
    $region9: #{tpu_custom_call.1} parent=1 // pred_fallthru
      _
    // Predicated region
    $region10: #{tpu_custom_call.1} parent=1 // pred_check
      _
    $region11: #{tpu_custom_call.1} parent=1 // pred_check_branch
      %35 = sbr.rel (0) target = $region13
    $region12: #{tpu_custom_call.1} parent=1 // pred_region
      %s37 = ssub.s32 4096, 4096
      %38 = vsyncadd [#allocation6], %s37
      %s39 = sshll.u32 [#allocation7], 4
      %s40 = int_to_ptr.vmem [resolvable:$true] %s39
      %45 = dma.hbm_to_vmem [thread:$0]  %s2, 4096, %s40, [#allocation6], 256, 256, 16
    $region13: #{tpu_custom_call.1} parent=1 // pred_fallthru
      _
    // Predicated region
    $region14: #{tpu_custom_call.1} parent=1 // pred_check
      _
    $region15: #{tpu_custom_call.1} parent=1 // pred_check_branch
      %47 = sbr.rel (0) target = $region17
    $region16: #{tpu_custom_call.1} parent=1 // pred_region
      %s49 = ssub.s32 8192, 8192
      %50 = vsyncadd [#allocation9], %s49
      %s51 = sshll.u32 [#allocation8], 4
      %s52 = int_to_ptr.vmem [resolvable:$true] %s51
      %57 = dma.hbm_to_vmem [thread:$0]  %s3, 8192, %s52, [#allocation9], 256, 256, 16
    $region17: #{tpu_custom_call.1} parent=1 // pred_fallthru
      _
    // Predicated region
    $region18: #{tpu_custom_call.1} parent=1 // pred_check
      _
    $region19: #{tpu_custom_call.1} parent=1 // pred_check_branch
      %59 = sbr.rel (0) target = $region21
    $region20: #{tpu_custom_call.1} parent=1 // pred_region
      _
    $region21: #{tpu_custom_call.1} parent=1 // pred_fallthru
      _
    // Predicated region
    $region22: #{tpu_custom_call.1} parent=1 // pred_check
      _
    $region23: #{tpu_custom_call.1} parent=1 // pred_check_branch
      %61 = sbr.rel (0) target = $region25
    $region24: #{tpu_custom_call.1} parent=1 // pred_region
      %62 = dma.done [#allocation3], 64
    $region25: #{tpu_custom_call.1} parent=1 // pred_fallthru
      _
    // Predicated region
    $region26: #{tpu_custom_call.1} parent=1 // pred_check
      _
    $region27: #{tpu_custom_call.1} parent=1 // pred_check_branch
      %64 = sbr.rel (0) target = $region29
    $region28: #{tpu_custom_call.1} parent=1 // pred_region
      %65 = dma.done [#allocation6], 128
    $region29: #{tpu_custom_call.1} parent=1 // pred_fallthru
      _
    // Predicated region
    $region30: #{tpu_custom_call.1} parent=1 // pred_check
      _
    $region31: #{tpu_custom_call.1} parent=1 // pred_check_branch
      %67 = sbr.rel (0) target = $region33
    $region32: #{tpu_custom_call.1} parent=1 // pred_region
      %68 = dma.done [#allocation6], 4096
    $region33: #{tpu_custom_call.1} parent=1 // pred_fallthru
      _
    // Predicated region
    $region34: #{tpu_custom_call.1} parent=1 // pred_check
      _
    $region35: #{tpu_custom_call.1} parent=1 // pred_check_branch
      %70 = sbr.rel (0) target = $region37
    $region36: #{tpu_custom_call.1} parent=1 // pred_region
      %71 = dma.done [#allocation9], 8192
    $region37: #{tpu_custom_call.1} parent=1 // pred_fallthru
      _
    %v72 = vld [vmem:[#allocation2] sm:$0xf]
    %v73 = vld [vmem:[#allocation5] sm:$0xff]
    %v74 = vld [vmem:[#allocation7] sm:$0xff]
    %v75 = vld [vmem:[#allocation7 + $0x8] sm:$0xff]
    %v76 = vld [vmem:[#allocation7 + $0x10] sm:$0xff]
    %v77 = vld [vmem:[#allocation7 + $0x18] sm:$0xff]
    %v78 = vld [vmem:[#allocation7 + $0x20] sm:$0xff]
    %v79 = vld [vmem:[#allocation7 + $0x28] sm:$0xff]
    %v80 = vld [vmem:[#allocation7 + $0x30] sm:$0xff]
    %v81 = vld [vmem:[#allocation7 + $0x38] sm:$0xff]
    %v82 = vld [vmem:[#allocation7 + $0x40] sm:$0xff]
    %v83 = vld [vmem:[#allocation7 + $0x48] sm:$0xff]
    %v84 = vld [vmem:[#allocation7 + $0x50] sm:$0xff]
    %v85 = vld [vmem:[#allocation7 + $0x58] sm:$0xff]
    %v86 = vld [vmem:[#allocation7 + $0x60] sm:$0xff]
    %v87 = vld [vmem:[#allocation7 + $0x68] sm:$0xff]
    %v88 = vld [vmem:[#allocation7 + $0x70] sm:$0xff]
    %v89 = vld [vmem:[#allocation7 + $0x78] sm:$0xff]
    %v90 = vld [vmem:[#allocation7 + $0x80] sm:$0xff]
    %v91 = vld [vmem:[#allocation7 + $0x88] sm:$0xff]
    %v92 = vld [vmem:[#allocation7 + $0x90] sm:$0xff]
    %v93 = vld [vmem:[#allocation7 + $0x98] sm:$0xff]
    %v94 = vld [vmem:[#allocation7 + $0xa0] sm:$0xff]
    %v95 = vld [vmem:[#allocation7 + $0xa8] sm:$0xff]
    %v96 = vld [vmem:[#allocation7 + $0xb0] sm:$0xff]
    %v97 = vld [vmem:[#allocation7 + $0xb8] sm:$0xff]
    %v98 = vld [vmem:[#allocation7 + $0xc0] sm:$0xff]
    %v99 = vld [vmem:[#allocation7 + $0xc8] sm:$0xff]
    %v100 = vld [vmem:[#allocation7 + $0xd0] sm:$0xff]
    %v101 = vld [vmem:[#allocation7 + $0xd8] sm:$0xff]
    %v102 = vld [vmem:[#allocation7 + $0xe0] sm:$0xff]
    %v103 = vld [vmem:[#allocation7 + $0xe8] sm:$0xff]
    %v104 = vld [vmem:[#allocation7 + $0xf0] sm:$0xff]
    %v105 = vld [vmem:[#allocation7 + $0xf8] sm:$0xff]
    %v106 = vld [vmem:[#allocation8] sm:$0xff]
    %v107 = vld [vmem:[#allocation8 + $0x8] sm:$0xff]
    %v108 = vld [vmem:[#allocation8 + $0x10] sm:$0xff]
    %v109 = vld [vmem:[#allocation8 + $0x18] sm:$0xff]
    %v110 = vld [vmem:[#allocation8 + $0x20] sm:$0xff]
    %v111 = vld [vmem:[#allocation8 + $0x28] sm:$0xff]
    %v112 = vld [vmem:[#allocation8 + $0x30] sm:$0xff]
    %v113 = vld [vmem:[#allocation8 + $0x38] sm:$0xff]
    %v114 = vld [vmem:[#allocation8 + $0x40] sm:$0xff]
    %v115 = vld [vmem:[#allocation8 + $0x48] sm:$0xff]
    %v116 = vld [vmem:[#allocation8 + $0x50] sm:$0xff]
    %v117 = vld [vmem:[#allocation8 + $0x58] sm:$0xff]
    %v118 = vld [vmem:[#allocation8 + $0x60] sm:$0xff]
    %v119 = vld [vmem:[#allocation8 + $0x68] sm:$0xff]
    %v120 = vld [vmem:[#allocation8 + $0x70] sm:$0xff]
    %v121 = vld [vmem:[#allocation8 + $0x78] sm:$0xff]
    %v122 = vld [vmem:[#allocation8 + $0x80] sm:$0xff]
    %v123 = vld [vmem:[#allocation8 + $0x88] sm:$0xff]
    %v124 = vld [vmem:[#allocation8 + $0x90] sm:$0xff]
    %v125 = vld [vmem:[#allocation8 + $0x98] sm:$0xff]
    %v126 = vld [vmem:[#allocation8 + $0xa0] sm:$0xff]
    %v127 = vld [vmem:[#allocation8 + $0xa8] sm:$0xff]
    %v128 = vld [vmem:[#allocation8 + $0xb0] sm:$0xff]
    %v129 = vld [vmem:[#allocation8 + $0xb8] sm:$0xff]
    %v130 = vld [vmem:[#allocation8 + $0xc0] sm:$0xff]
    %v131 = vld [vmem:[#allocation8 + $0xc8] sm:$0xff]
    %v132 = vld [vmem:[#allocation8 + $0xd0] sm:$0xff]
    %v133 = vld [vmem:[#allocation8 + $0xd8] sm:$0xff]
    %v134 = vld [vmem:[#allocation8 + $0xe0] sm:$0xff]
    %v135 = vld [vmem:[#allocation8 + $0xe8] sm:$0xff]
    %v136 = vld [vmem:[#allocation8 + $0xf0] sm:$0xff]
    %v137 = vld [vmem:[#allocation8 + $0xf8] sm:$0xff]
    %v138 = vld [vmem:[#allocation8 + $0x100] sm:$0xff]
    %v139 = vld [vmem:[#allocation8 + $0x108] sm:$0xff]
    %v140 = vld [vmem:[#allocation8 + $0x110] sm:$0xff]
    %v141 = vld [vmem:[#allocation8 + $0x118] sm:$0xff]
    %v142 = vld [vmem:[#allocation8 + $0x120] sm:$0xff]
    %v143 = vld [vmem:[#allocation8 + $0x128] sm:$0xff]
    %v144 = vld [vmem:[#allocation8 + $0x130] sm:$0xff]
    %v145 = vld [vmem:[#allocation8 + $0x138] sm:$0xff]
    %v146 = vld [vmem:[#allocation8 + $0x140] sm:$0xff]
    %v147 = vld [vmem:[#allocation8 + $0x148] sm:$0xff]
    %v148 = vld [vmem:[#allocation8 + $0x150] sm:$0xff]
    %v149 = vld [vmem:[#allocation8 + $0x158] sm:$0xff]
    %v150 = vld [vmem:[#allocation8 + $0x160] sm:$0xff]
    %v151 = vld [vmem:[#allocation8 + $0x168] sm:$0xff]
    %v152 = vld [vmem:[#allocation8 + $0x170] sm:$0xff]
    %v153 = vld [vmem:[#allocation8 + $0x178] sm:$0xff]
    %v154 = vld [vmem:[#allocation8 + $0x180] sm:$0xff]
    %v155 = vld [vmem:[#allocation8 + $0x188] sm:$0xff]
    %v156 = vld [vmem:[#allocation8 + $0x190] sm:$0xff]
    %v157 = vld [vmem:[#allocation8 + $0x198] sm:$0xff]
    %v158 = vld [vmem:[#allocation8 + $0x1a0] sm:$0xff]
    %v159 = vld [vmem:[#allocation8 + $0x1a8] sm:$0xff]
    %v160 = vld [vmem:[#allocation8 + $0x1b0] sm:$0xff]
    %v161 = vld [vmem:[#allocation8 + $0x1b8] sm:$0xff]
    %v162 = vld [vmem:[#allocation8 + $0x1c0] sm:$0xff]
    %v163 = vld [vmem:[#allocation8 + $0x1c8] sm:$0xff]
    %v164 = vld [vmem:[#allocation8 + $0x1d0] sm:$0xff]
    %v165 = vld [vmem:[#allocation8 + $0x1d8] sm:$0xff]
    %v166 = vld [vmem:[#allocation8 + $0x1e0] sm:$0xff]
    %v167 = vld [vmem:[#allocation8 + $0x1e8] sm:$0xff]
    %v168 = vld [vmem:[#allocation8 + $0x1f0] sm:$0xff]
    %v169 = vld [vmem:[#allocation8 + $0x1f8] sm:$0xff]
    %v171 = vcombine.high %v73, %v73
    %173 = vmatprep.subr.mxu0 %v107
    %174 = vmatpush1.msra.mxu0 %v106
    %175 = vmatprep.subr.mxu0 %v109
    %176 = vmatpush1.msra.mxu0 %v108
    %177 = vmatprep.subr.mxu0 %v111
    %178 = vmatpush1.msra.mxu0 %v110
    %179 = vmatprep.subr.mxu0 %v113
    %180 = vmatpush1.msra.mxu0 %v112
    %181 = vmatprep.subr.mxu0 %v115
    %182 = vmatpush1.msra.mxu0 %v114
    %183 = vmatprep.subr.mxu0 %v117
    %184 = vmatpush1.msra.mxu0 %v116
    %185 = vmatprep.subr.mxu0 %v119
    %186 = vmatpush1.msra.mxu0 %v118
    %187 = vmatprep.subr.mxu0 %v121
    %188 = vmatpush1.msra.mxu0 %v120
    %189 = vmatprep.subr.mxu0 %v123
    %190 = vmatpush1.msra.mxu0 %v122
    %191 = vmatprep.subr.mxu0 %v125
    %192 = vmatpush1.msra.mxu0 %v124
    %193 = vmatprep.subr.mxu0 %v127
    %194 = vmatpush1.msra.mxu0 %v126
    %195 = vmatprep.subr.mxu0 %v129
    %196 = vmatpush1.msra.mxu0 %v128
    %197 = vmatprep.subr.mxu0 %v131
    %198 = vmatpush1.msra.mxu0 %v130
    %199 = vmatprep.subr.mxu0 %v133
    %200 = vmatpush1.msra.mxu0 %v132
    %201 = vmatprep.subr.mxu0 %v135
    %202 = vmatpush1.msra.mxu0 %v134
    %203 = vmatprep.subr.mxu0 %v137
    %204 = vmatpush1.msra.mxu0 %v136
    %205 = vmatprep.subr.mxu0 %v139
    %206 = vmatpush1.msra.mxu0 %v138
    %207 = vmatprep.subr.mxu0 %v141
    %208 = vmatpush1.msra.mxu0 %v140
    %209 = vmatprep.subr.mxu0 %v143
    %210 = vmatpush1.msra.mxu0 %v142
    %211 = vmatprep.subr.mxu0 %v145
    %212 = vmatpush1.msra.mxu0 %v144
    %213 = vmatprep.subr.mxu0 %v147
    %214 = vmatpush1.msra.mxu0 %v146
    %215 = vmatprep.subr.mxu0 %v149
    %216 = vmatpush1.msra.mxu0 %v148
    %217 = vmatprep.subr.mxu0 %v151
    %218 = vmatpush1.msra.mxu0 %v150
    %219 = vmatprep.subr.mxu0 %v153
    %220 = vmatpush1.msra.mxu0 %v152
    %221 = vmatprep.subr.mxu0 %v155
    %222 = vmatpush1.msra.mxu0 %v154
    %223 = vmatprep.subr.mxu0 %v157
    %224 = vmatpush1.msra.mxu0 %v156
    %225 = vmatprep.subr.mxu0 %v159
    %226 = vmatpush1.msra.mxu0 %v158
    %227 = vmatprep.subr.mxu0 %v161
    %228 = vmatpush1.msra.mxu0 %v160
    %229 = vmatprep.subr.mxu0 %v163
    %230 = vmatpush1.msra.mxu0 %v162
    %231 = vmatprep.subr.mxu0 %v165
    %232 = vmatpush1.msra.mxu0 %v164
    %233 = vmatprep.subr.mxu0 %v167
    %234 = vmatpush1.msra.mxu0 %v166
    %235 = vmatprep.subr.mxu0 %v169
    %236 = vmatpush1.msra.mxu0 %v168
    %237 = vmatprep.mubr.f32.mxu0 %v171
    %238 = vmatmul.mubr.f32.gmra.mrb[0].mxu0 %v73
    %v239 = vpop.f32.mrb[0].mxu0
    %v240 = vadd.f32 0.0, %v239
    %v241 = vpop.f32.mrb[0].mxu0
    %v242 = vadd.f32 0.0, %v241
    %243 = vdwg.mxu0
    %244 = vmatprep.subr.mxu0 %v75
    %245 = vmatpush1.msra.mxu0 %v74
    %246 = vmatprep.subr.mxu0 %v77
    %247 = vmatpush1.msra.mxu0 %v76
    %248 = vmatprep.subr.mxu0 %v79
    %249 = vmatpush1.msra.mxu0 %v78
    %250 = vmatprep.subr.mxu0 %v81
    %251 = vmatpush1.msra.mxu0 %v80
    %252 = vmatprep.subr.mxu0 %v83
    %253 = vmatpush1.msra.mxu0 %v82
    %254 = vmatprep.subr.mxu0 %v85
    %255 = vmatpush1.msra.mxu0 %v84
    %256 = vmatprep.subr.mxu0 %v87
    %257 = vmatpush1.msra.mxu0 %v86
    %258 = vmatprep.subr.mxu0 %v89
    %259 = vmatpush1.msra.mxu0 %v88
    %260 = vmatprep.subr.mxu0 %v91
    %261 = vmatpush1.msra.mxu0 %v90
    %262 = vmatprep.subr.mxu0 %v93
    %263 = vmatpush1.msra.mxu0 %v92
    %264 = vmatprep.subr.mxu0 %v95
    %265 = vmatpush1.msra.mxu0 %v94
    %266 = vmatprep.subr.mxu0 %v97
    %267 = vmatpush1.msra.mxu0 %v96
    %268 = vmatprep.subr.mxu0 %v99
    %269 = vmatpush1.msra.mxu0 %v98
    %270 = vmatprep.subr.mxu0 %v101
    %271 = vmatpush1.msra.mxu0 %v100
    %272 = vmatprep.subr.mxu0 %v103
    %273 = vmatpush1.msra.mxu0 %v102
    %274 = vmatprep.subr.mxu0 %v105
    %275 = vmatpush1.msra.mxu0 %v104
    %276 = vmatprep.subr.mxu0 0.0
    %277 = vmatpush1.msra.mxu0 0.0
    %278 = vmatprep.subr.mxu0 0.0
    %279 = vmatpush1.msra.mxu0 0.0
    %280 = vmatprep.subr.mxu0 0.0
    %281 = vmatpush1.msra.mxu0 0.0
    %282 = vmatprep.subr.mxu0 0.0
    %283 = vmatpush1.msra.mxu0 0.0
    %284 = vmatprep.subr.mxu0 0.0
    %285 = vmatpush1.msra.mxu0 0.0
    %286 = vmatprep.subr.mxu0 0.0
    %287 = vmatpush1.msra.mxu0 0.0
    %288 = vmatprep.subr.mxu0 0.0
    %289 = vmatpush1.msra.mxu0 0.0
    %290 = vmatprep.subr.mxu0 0.0
    %291 = vmatpush1.msra.mxu0 0.0
    %292 = vmatprep.subr.mxu0 0.0
    %293 = vmatpush1.msra.mxu0 0.0
    %294 = vmatprep.subr.mxu0 0.0
    %295 = vmatpush1.msra.mxu0 0.0
    %296 = vmatprep.subr.mxu0 0.0
    %297 = vmatpush1.msra.mxu0 0.0
    %298 = vmatprep.subr.mxu0 0.0
    %299 = vmatpush1.msra.mxu0 0.0
    %300 = vmatprep.subr.mxu0 0.0
    %301 = vmatpush1.msra.mxu0 0.0
    %302 = vmatprep.subr.mxu0 0.0
    %303 = vmatpush1.msra.mxu0 0.0
    %304 = vmatprep.subr.mxu0 0.0
    %305 = vmatpush1.msra.mxu0 0.0
    %306 = vmatprep.subr.mxu0 0.0
    %307 = vmatpush1.msra.mxu0 0.0
    %308 = vmatprep.mubr.f32.mxu0 0.0
    %309 = vmatmul.mubr.f32.gmra.mrb[0].mxu0 %v72
    %v310 = vpop.f32.mrb[0].mxu0
    %v311 = vadd.f32 %v240, %v310
    %v312 = vpop.f32.mrb[0].mxu0
    %v313 = vadd.f32 %v242, %v312
    %314 = vdwg.mxu0
    %v315 = vld [vmem:[%s4] sm:$0x3]
    %v317 = vlaneseq
    %v318 = vshrl.u32 %v317, 7
    %v319 = vsub.s32 0, %v318
    %v320 = vrot.slane %v315, %v319
    %v321 = vlaneseq
    %v322 = vshrl.u32 %v321, 7
    %v323 = vsub.s32 1, %v322
    %v324 = vrot.slane %v315, %v323
    %v327 = vadd.f32 %v311, %v320
    %v328 = vadd.f32 %v313, %v324
    %v329 = vtanh.pop %v327
    %v330 = vmul.f32 %v328, 0.5
    %v331 = vtanh.pop %v330
    %v332 = vadd.f32 %v331, 1.0
    %v333 = vmul.f32 %v332, 0.5
    %v334 = vsub.f32 %v329, %v72
    %v335 = vmul.f32 %v333, %v334
    %v336 = vadd.f32 %v72, %v335
    %337 = vst [vmem:[#allocation10] sm:$0xf] %v336
    // Predicated region
    $region38: #{tpu_custom_call.1} parent=1 // pred_check
      _
    $region39: #{tpu_custom_call.1} parent=1 // pred_check_branch
      %339 = sbr.rel (0) target = $region41
    $region40: #{tpu_custom_call.1} parent=1 // pred_region
      %s341 = ssub.s32 64, 64
      %342 = vsyncadd [#allocation4], %s341
      %s344 = sshll.u32 [#allocation10], 4
      %s345 = int_to_ptr.vmem [resolvable:$true] %s344
      %347 = dma.vmem_to_hbm [thread:$0]  %s345, 64, %s5, [#allocation4]
    $region41: #{tpu_custom_call.1} parent=1 // pred_fallthru
      _
    // Predicated region
    $region42: #{tpu_custom_call.1} parent=1 // pred_check
      _
    $region43: #{tpu_custom_call.1} parent=1 // pred_check_branch
      %349 = sbr.rel (0) target = $region45
    $region44: #{tpu_custom_call.1} parent=1 // pred_region
      %350 = dma.done [#allocation4], 64
    $region45: #{tpu_custom_call.1} parent=1 // pred_fallthru
      _
    %351 = vsyncpa [#allocation3], 1
    %352 = vsyncpa [#allocation6], 1
    %353 = vsyncpa [#allocation9], 1
    %354 = vsyncpa [#allocation4], 1

</llo_original>
